<compile_context>
chip_gen: v7x
topology: tpu7x:2x2x1
jax: 0.10.0
libtpu: 0.0.40
codegen_flags: <defaults>
</compile_context>

<pallas_src>
import jax
import jax.numpy as jnp
from jax.experimental import pallas as pl
from jax.experimental.pallas import tpu as pltpu


def _linear_kernel(w_ref, b_ref, x_ref, o_ref):
    """y[o, :] = sum_k w[o, k] * x[k, :] + b[o]  (batch on the 128-lane axis).

    w_ref : SMEM (OUT*IN,) f32, row-major over (out, in)
    b_ref : SMEM (OUT,)    f32
    x_ref : VMEM (IN, TN)  activations, batch on lanes
    o_ref : VMEM (OUT, TN) output, batch on lanes
    """
    in_features = x_ref.shape[0]
    out_features = o_ref.shape[0]

    # Single upcast per tile (keeps v5e's f32-only VPU happy; lets v6e/v7x
    # callers transport bf16 for bandwidth while accumulating in f32).
    x = x_ref[...].astype(jnp.float32)              # (IN, TN)

    # Whole-vreg FMAs; IN and OUT are tiny compile-time constants (3 and 1).
    for o in range(out_features):
        acc = w_ref[o * in_features] * x[0:1, :]
        for k in range(1, in_features):
            acc = acc + w_ref[o * in_features + k] * x[k:k + 1, :]
        acc = acc + b_ref[o]                        # bias last: matches x@W^T + b
        # Output rows stack along sublanes -> lane-dense, unmasked store.
        o_ref[o:o + 1, :] = acc.astype(o_ref.dtype)


def linear_forward(x, w, b, *, lane_tile=512):
    """Pallas forward for nn.Linear(3, 1).

    x: [batch, in_features], w: [out_features, in_features], b: [out_features]
    returns [batch, out_features]
    """
    batch, in_features = x.shape
    out_features = w.shape[0]

    # Wrapper-side layout plumbing (free for XLA): flat scalar params, and
    # batch moved onto the lane axis.
    w_flat = w.reshape(out_features * in_features).astype(jnp.float32)
    b_flat = b.reshape(out_features).astype(jnp.float32)
    x_t = x.T                                       # (IN, B)

    if batch <= lane_tile:
        # Tiny problem: single whole-array invocation, no grid.  At this size
        # the wall clock is entirely pallas_call launch/DMA-setup overhead;
        # TODO(synk): fuse into the surrounding Pallas kernel / adjacent ops
        # if this linear ever sits on a hot path.
        y_t = pl.pallas_call(
            _linear_kernel,
            out_shape=jax.ShapeDtypeStruct((out_features, batch), x.dtype),
            in_specs=[
                pl.BlockSpec(memory_space=pltpu.MemorySpace.SMEM),   # w scalars
                pl.BlockSpec(memory_space=pltpu.MemorySpace.SMEM),   # b scalar
                pl.BlockSpec(memory_space=pltpu.MemorySpace.VMEM),   # x (IN, B)
            ],
            out_specs=pl.BlockSpec(memory_space=pltpu.MemorySpace.VMEM),
        )(w_flat, b_flat, x_t)
    else:
        # Large-batch path: tile the lane (batch) axis; "parallel" shards the
        # grid across v7x's 2 TensorCores (no-op on v5e/v6e).  A (3, lane_tile)
        # f32 block is a few KiB, so even with double buffering we are far
        # under v7x's 64 MiB VMEM -- raise lane_tile freely for more overlap.
        padded = pl.cdiv(batch, lane_tile) * lane_tile
        if padded != batch:
            x_t = jnp.pad(x_t, ((0, 0), (0, padded - batch)))
        n_tiles = padded // lane_tile

        y_t = pl.pallas_call(
            _linear_kernel,
            out_shape=jax.ShapeDtypeStruct((out_features, padded), x.dtype),
            grid_spec=pltpu.PrefetchScalarGridSpec(
                num_scalar_prefetch=2,              # w_flat, b_flat -> SMEM
                grid=(n_tiles,),
                in_specs=[
                    pl.BlockSpec((in_features, lane_tile),
                                 lambda i, w_s, b_s: (0, i)),
                ],
                out_specs=pl.BlockSpec((out_features, lane_tile),
                                       lambda i, w_s, b_s: (0, i)),
            ),
            compiler_params=pltpu.CompilerParams(
                dimension_semantics=("parallel",)),
        )(w_flat, b_flat, x_t)
        y_t = y_t[:, :batch]

    return y_t.T                                    # (B, OUT)


if __name__ == "__main__":
    key = jax.random.PRNGKey(0)
    k_x, k_w, k_b, k_x2 = jax.random.split(key, 4)

    in_features, out_features = 3, 1

    # Deterministic parameter init (mimics nn.Linear uniform(-1/sqrt(in), 1/sqrt(in)))
    bound = 1.0 / jnp.sqrt(jnp.float32(in_features))
    w = jax.random.uniform(k_w, (out_features, in_features), jnp.float32,
                           minval=-bound, maxval=bound)
    b = jax.random.uniform(k_b, (out_features,), jnp.float32,
                           minval=-bound, maxval=bound)

    # Small-batch path (the shape the module implies: [batch, 3] -> [batch, 1]).
    batch = 8
    x = jax.random.normal(k_x, (batch, in_features), jnp.float32)
    y = linear_forward(x, w, b)
    jax.block_until_ready(y)
    y_ref = x @ w.T + b
    assert y.shape == (batch, out_features)
    assert jnp.allclose(y, y_ref, atol=1e-5, rtol=1e-5)

    # Tiled / megacore path (exercises grid, lane padding, scalar prefetch).
    batch2 = 300
    x2 = jax.random.normal(k_x2, (batch2, in_features), jnp.float32)
    y2 = linear_forward(x2, w, b, lane_tile=128)
    jax.block_until_ready(y2)
    y2_ref = x2 @ w.T + b
    assert y2.shape == (batch2, out_features)
    assert jnp.allclose(y2, y2_ref, atol=1e-5, rtol=1e-5)

    print("KERNEL_OK")
</pallas_src>

<mosaic_0001>
module attributes {stable_mosaic.version = 11 : i64} {
  func.func @_linear_kernel(%arg0: memref<3xf32, #tpu.memory_space<smem>>, %arg1: memref<1xf32, #tpu.memory_space<smem>>, %arg2: memref<3x8xf32, #tpu.memory_space<vmem>>, %arg3: memref<1x8xf32, #tpu.memory_space<vmem>>) attributes {dimension_semantics = [], scalar_prefetch = 0 : i64, scratch_operands = 0 : i64, tpu.core_type = #tpu.core_type<tc>} {
    %c0 = arith.constant 0 : index
    %c0_0 = arith.constant 0 : index
    %0 = vector.load %arg2[%c0, %c0_0] : memref<3x8xf32, #tpu.memory_space<vmem>>, vector<3x8xf32>
    %c0_1 = arith.constant 0 : index
    %1 = memref.load %arg0[%c0_1] : memref<3xf32, #tpu.memory_space<smem>>
    %2 = vector.extract_strided_slice %0 {offsets = [0, 0], sizes = [1, 8], strides = [1, 1]} : vector<3x8xf32> to vector<1x8xf32>
    %3 = vector.broadcast %1 : f32 to vector<1x8xf32>
    %4 = arith.mulf %3, %2 : vector<1x8xf32>
    %c1 = arith.constant 1 : index
    %5 = memref.load %arg0[%c1] : memref<3xf32, #tpu.memory_space<smem>>
    %6 = vector.extract_strided_slice %0 {offsets = [1, 0], sizes = [1, 8], strides = [1, 1]} : vector<3x8xf32> to vector<1x8xf32>
    %7 = vector.broadcast %5 : f32 to vector<1x8xf32>
    %8 = arith.mulf %7, %6 : vector<1x8xf32>
    %9 = arith.addf %4, %8 : vector<1x8xf32>
    %c2 = arith.constant 2 : index
    %10 = memref.load %arg0[%c2] : memref<3xf32, #tpu.memory_space<smem>>
    %11 = vector.extract_strided_slice %0 {offsets = [2, 0], sizes = [1, 8], strides = [1, 1]} : vector<3x8xf32> to vector<1x8xf32>
    %12 = vector.broadcast %10 : f32 to vector<1x8xf32>
    %13 = arith.mulf %12, %11 : vector<1x8xf32>
    %14 = arith.addf %9, %13 : vector<1x8xf32>
    %c0_2 = arith.constant 0 : index
    %15 = memref.load %arg1[%c0_2] : memref<1xf32, #tpu.memory_space<smem>>
    %16 = vector.broadcast %15 : f32 to vector<1x8xf32>
    %17 = arith.addf %14, %16 : vector<1x8xf32>
    %c0_3 = arith.constant 0 : index
    %c0_4 = arith.constant 0 : index
    %18 = vector.load %arg3[%c0_3, %c0_4] : memref<1x8xf32, #tpu.memory_space<vmem>>, vector<1x8xf32>
    tpu.vector_store %arg3[%c0_3, %c0_4], %17 {strides = array<i32>} : memref<1x8xf32, #tpu.memory_space<vmem>>, vector<1x8xf32>,
    return
  }
}

</mosaic_0001>

<llo_original>
// kernel: tpu_custom_call.1
$region0: #{tpu_custom_call.1}
  #allocation0 [shape = 'u32[]', space=smem, size = 0x4, offset = 0x4, fixed_abs, tag = 'smem constant byte address 0x4 - core index']
  #allocation1 [shape = 'u32[144,128]{1,0:T(1,128)}', space=vmem, size = 0x12000, scoped, tag = 'internal scratch']
  #allocation2 [shape = 'f32[1]{0:T(128)S(6)}', space=smem, size = 0x200, scoped, tag = 'scoped memory for tpu_custom_call.1']
  %s0 = inlined_call_operand.vmem [shape: f32[3], index: 0, kind: input, shape index: {}]
  %s1 = inlined_call_operand.<no memory space> [shape: f32[1], index: 1, kind: input, shape index: {}]
  %s2 = inlined_call_operand.vmem [shape: f32[3,8], index: 2, kind: input, shape index: {}]
  %s3 = inlined_call_operand.hbm [shape: f32[1,8], index: 3, kind: output, shape index: {}]
  %s4 = sld [smem:[#allocation0]]
  $region26: #{tpu_custom_call.1} parent=0
    _
  %s6 = ssub.s32 1, %s4
  %s7 = scalar_select 0, %s6, %s4
  %8 = sst [smem:[#allocation2]] %s1
  $region1: #{tpu_custom_call.1} parent=0
    #allocation3 [shape = 'u8[512]{0}', space=smem, size = 0x200, scoped, tag = 'input window, operand 0, single buffered']
    #allocation4 [shape = 's32[1]{0}', space=sflag, size = 0x4, scoped, tag = 'scoped memory for tpu_custom_call.1']
    #allocation5 [shape = 's32[1]{0}', space=sflag, size = 0x4, scoped, tag = 'scoped memory for tpu_custom_call.1']
    #allocation6 [shape = 'u8[512]{0}', space=vmem, size = 0x400, scoped, tag = 'output window, operand 0, single buffered']
    %9 = vsyncpa [#allocation5], 0
    %10 = vsyncpa [#allocation4], 0
    // Predicated region
    $region2: #{tpu_custom_call.1} parent=1 // pred_check
      _
    $region3: #{tpu_custom_call.1} parent=1 // pred_check_branch
      %12 = sbr.rel (0) target = $region5
    $region4: #{tpu_custom_call.1} parent=1 // pred_region
      %s14 = ssub.s32 16, 16
      %15 = vsyncadd [#allocation5], %s14
      %s17 = sshll.u32 %s0, 4
      %s18 = int_to_ptr.vmem [resolvable:$true] %s17
      %20 = dma.vmem_to_smem %s18, 16, [#allocation3], [#allocation5]
    $region5: #{tpu_custom_call.1} parent=1 // pred_fallthru
      _
    // Predicated region
    $region6: #{tpu_custom_call.1} parent=1 // pred_check
      _
    $region7: #{tpu_custom_call.1} parent=1 // pred_check_branch
      %22 = sbr.rel (0) target = $region9
    $region8: #{tpu_custom_call.1} parent=1 // pred_region
      _
    $region9: #{tpu_custom_call.1} parent=1 // pred_fallthru
      _
    // Predicated region
    $region10: #{tpu_custom_call.1} parent=1 // pred_check
      _
    $region11: #{tpu_custom_call.1} parent=1 // pred_check_branch
      %24 = sbr.rel (0) target = $region13
    $region12: #{tpu_custom_call.1} parent=1 // pred_region
      _
    $region13: #{tpu_custom_call.1} parent=1 // pred_fallthru
      _
    // Predicated region
    $region14: #{tpu_custom_call.1} parent=1 // pred_check
      _
    $region15: #{tpu_custom_call.1} parent=1 // pred_check_branch
      %26 = sbr.rel (0) target = $region17
    $region16: #{tpu_custom_call.1} parent=1 // pred_region
      %27 = dma.done [#allocation5], 16
    $region17: #{tpu_custom_call.1} parent=1 // pred_fallthru
      _
    %28 = sfence
    %v29 = vld [vmem:[%s2] sm:$0x7]
    %s30 = sld [smem:[#allocation3]]
    %v31 = vstv %s30
    %v32 = vmul.f32 %v31, %v29
    %s33 = sld [smem:[#allocation3 + $0x1]]
    %v34 = vstv %s33
    %v35 = vmul.f32 %v34, %v29
    %v37 = vrot.slane %v35, 1
    %v39 = vadd.f32 %v32, %v37
    %s40 = sld [smem:[#allocation3 + $0x2]]
    %v41 = vstv %s40
    %v42 = vmul.f32 %v41, %v29
    %v44 = vrot.slane %v42, 2
    %v46 = vadd.f32 %v39, %v44
    %s47 = sld [smem:[#allocation2]]
    %v48 = vstv %s47
    %v49 = vadd.f32 %v46, %v48
    %vm50 = vcmask 57344
    %51 = vst.msk [vmem:[#allocation6] sm:$0x1] %vm50, %v49
    // Predicated region
    $region18: #{tpu_custom_call.1} parent=1 // pred_check
      _
    $region19: #{tpu_custom_call.1} parent=1 // pred_check_branch
      %53 = sbr.rel (0) target = $region21
    $region20: #{tpu_custom_call.1} parent=1 // pred_region
      %s55 = ssub.s32 16, 16
      %56 = vsyncadd [#allocation4], %s55
      %s58 = sshll.u32 [#allocation6], 4
      %s59 = int_to_ptr.vmem [resolvable:$true] %s58
      %61 = dma.vmem_to_hbm [thread:$0]  %s59, 16, %s3, [#allocation4]
    $region21: #{tpu_custom_call.1} parent=1 // pred_fallthru
      _
    // Predicated region
    $region22: #{tpu_custom_call.1} parent=1 // pred_check
      _
    $region23: #{tpu_custom_call.1} parent=1 // pred_check_branch
      %63 = sbr.rel (0) target = $region25
    $region24: #{tpu_custom_call.1} parent=1 // pred_region
      %64 = dma.done [#allocation4], 16
    $region25: #{tpu_custom_call.1} parent=1 // pred_fallthru
      _
    %65 = vsyncpa [#allocation4], 1
    %66 = vsyncpa [#allocation5], 1

</llo_original>
